<compile_context>
chip_gen: v7x
topology: tpu7x:2x2x1
jax: 0.10.0
libtpu: 0.0.40
codegen_flags: <defaults>
</compile_context>

<pallas_src>
import functools

import jax
import jax.numpy as jnp
from jax.experimental import pallas as pl
from jax.experimental.pallas import tpu as pltpu

_LANES = 128


def _round_up(v: int, m: int) -> int:
    return ((v + m - 1) // m) * m


def _leaky_relu_kernel(x_ref, o_ref, *, neg_slope):
    # 1 vld + 1 vst + a few VALU ops per vreg; the store slot binds far above
    # HBM bandwidth, so the body is not the bottleneck -- keep it simple.
    x = x_ref[...]
    o_ref[...] = jnp.where(x >= 0, x, x * jnp.asarray(neg_slope, x.dtype))


def _default_block_bytes() -> int:
    """Per-generation block-byte target (DMA roofline plateau vs. step overhead)."""
    try:
        kind = jax.devices()[0].device_kind.lower()
    except Exception:
        kind = ""
    if "v7" in kind:
        # ~3.2 TB/s HBM halves per-step DMA time; bigger blocks keep the fixed
        # ~0.35 us grid-step overhead <5%.  Double-buffered in+out ~24 MiB.
        return 6 << 20
    if "v5e" in kind or "v5 lite" in kind or "v5lite" in kind:
        # v5e is already at the 85-86% roofline plateau by ~2 MiB tiles and has
        # only a 16 MiB scoped-VMEM default; stay conservative.
        return 2 << 20
    # v6e / unknown: 4 MiB blocks, 16 MiB double-buffered fits the 32 MiB default.
    return 4 << 20


def leaky_relu(x, neg_slope: float = 0.01, *, block_bytes: int | None = None):
    """Pallas TPU LeakyReLU over an arbitrary-shaped input."""
    orig_shape = x.shape
    orig_dtype = x.dtype
    n = x.size
    if n == 0:
        return x
    itemsize = jnp.dtype(orig_dtype).itemsize

    if block_bytes is None:
        block_bytes = _default_block_bytes()
    # Hard cap: 8 MiB blocks => ~32 MiB for 2x in + 2x out double buffering,
    # leaving headroom on v7x's 64 MiB/TC physical VMEM.
    block_bytes = min(int(block_bytes), 8 << 20)

    # Native sublane tiling: 8 rows for 32-bit, 16 for bf16, 32 for 8-bit dtypes.
    packing = max(1, 4 // itemsize)
    row_align = 8 * packing

    # Lane-dense slab.  Pad only when n is not a multiple of 128 (lane count);
    # sublane raggedness (rows % row_align != 0) needs no pad at all -- the
    # cdiv grid's last partial block reads OOB padding and its OOB writes are
    # discarded, which is safe for an elementwise op.
    pad = (-n) % _LANES
    x_flat = jnp.ravel(x)
    if pad:
        # TODO(synk): a 1-D BlockSpec over the unpadded flat array would avoid
        # this full-tensor copy; the minimal lane-only pad is kept as the
        # guaranteed-lowering fallback for misaligned sizes.
        x_flat = jnp.concatenate([x_flat, jnp.zeros((pad,), dtype=orig_dtype)])
    rows = (n + pad) // _LANES
    x2d = x_flat.reshape(rows, _LANES)

    slab_bytes = rows * _LANES * itemsize
    if slab_bytes <= min(block_bytes, 1 << 20):
        # Small input: single block equal to the full array (always legal).
        br = rows
    else:
        # Byte-targeted block rows, aligned to the native sublane tiling.
        rows_per_target = max(1, block_bytes // (_LANES * itemsize))
        br = max(row_align, (rows_per_target // row_align) * row_align)
        # Guarantee >=2 grid steps so DMA/compute/writeback overlap and, on
        # v7x, the second TensorCore gets work through the "parallel" axis.
        br = min(br, _round_up(pl.cdiv(rows, 2), row_align))
        br = max(br, row_align)
    grid = (pl.cdiv(rows, br),)

    # Scoped-VMEM budget: 2x in + 2x out double buffers plus slack, capped well
    # under v7x's 64 MiB/TC (and trivially within v5e/v6e's 128 MiB physical).
    blk_bytes_actual = br * _LANES * itemsize
    vmem_limit = int(min(48 << 20, max(16 << 20, 4 * blk_bytes_actual + (2 << 20))))

    kernel = functools.partial(_leaky_relu_kernel, neg_slope=neg_slope)
    out2d = pl.pallas_call(
        kernel,
        out_shape=jax.ShapeDtypeStruct((rows, _LANES), orig_dtype),
        grid_spec=pltpu.PrefetchScalarGridSpec(
            num_scalar_prefetch=0,
            grid=grid,
            in_specs=[pl.BlockSpec((br, _LANES), lambda i: (i, 0))],
            out_specs=pl.BlockSpec((br, _LANES), lambda i: (i, 0)),
        ),
        compiler_params=pltpu.CompilerParams(
            dimension_semantics=("parallel",),
            vmem_limit_bytes=vmem_limit,
        ),
    )(x2d)

    if pad:
        return out2d.reshape(-1)[:n].reshape(orig_shape)
    return out2d.reshape(orig_shape)


class LeakyReLU:
    """JAX/Pallas port of torchact.nn.LeakyReLU."""

    def __init__(self, neg_slope: float = 0.01, inplace: bool = False):
        self.neg_slope = neg_slope
        self.inplace = inplace  # no-op in JAX (functional arrays)

    def __call__(self, x):
        return leaky_relu(x, self.neg_slope)


if __name__ == "__main__":
    key = jax.random.PRNGKey(0)
    m = LeakyReLU(neg_slope=0.01)

    # NCHW-like small input: batch=2, channels=4, spatial=16x16.
    # (2048 elements: zero-copy path, single full-array block.)
    x = jax.random.normal(key, (2, 4, 16, 16), dtype=jnp.float32)
    y = m(x)
    jax.block_until_ready(y)
    y_ref = jnp.where(x >= 0, x, 0.01 * x)
    assert y.shape == x.shape and y.dtype == x.dtype
    assert jnp.allclose(y, y_ref, atol=1e-6), "mismatch vs reference (NCHW)"

    # Docstring example (exercises the lane-pad fallback path, n % 128 != 0).
    v = jnp.array([1.0, -2.0, 0.0, 3.0], dtype=jnp.float32)
    out_v = m(v)
    jax.block_until_ready(out_v)
    assert jnp.allclose(out_v, jnp.array([1.0, -0.02, 0.0, 3.0]), atol=1e-6)

    # Multi-block path (byte-targeted block forced small: 8x128 f32 blocks).
    x2 = jax.random.normal(jax.random.PRNGKey(1), (40, 128), dtype=jnp.float32)
    y2 = leaky_relu(x2, 0.01, block_bytes=8 * 128 * 4)
    jax.block_until_ready(y2)
    assert jnp.allclose(y2, jnp.where(x2 >= 0, x2, 0.01 * x2), atol=1e-6)

    # Ragged-sublane bf16 path: rows=40 not a multiple of row_align=16, no pad
    # copy, last block partially OOB (reads padding, writes discarded).
    x3 = jax.random.normal(jax.random.PRNGKey(2), (40, 128)).astype(jnp.bfloat16)
    y3 = leaky_relu(x3, 0.01, block_bytes=16 * 128 * 2)
    jax.block_until_ready(y3)
    y3_ref = jnp.where(x3 >= 0, x3, x3 * jnp.asarray(0.01, jnp.bfloat16))
    assert y3.dtype == jnp.bfloat16
    assert jnp.allclose(y3.astype(jnp.float32), y3_ref.astype(jnp.float32), atol=1e-3)

    print("KERNEL_OK")
</pallas_src>

<mosaic_0001>
module attributes {stable_mosaic.version = 11 : i64} {
  func.func @_leaky_relu_kernel(%arg0: i32, %arg1: memref<16x128xf32, #tpu.memory_space<vmem>>, %arg2: memref<16x128xf32, #tpu.memory_space<vmem>>) attributes {dimension_semantics = [#tpu.dimension_semantics<parallel>], iteration_bounds = array<i64: 1>, scalar_prefetch = 0 : i64, scratch_operands = 0 : i64, tpu.core_type = #tpu.core_type<tc>, window_params = [{transform_indices = @transform_0, window_bounds = array<i64: 16, 128>}, {transform_indices = @transform_1, window_bounds = array<i64: 16, 128>}]} {
    %c0 = arith.constant 0 : index
    %c0_0 = arith.constant 0 : index
    %0 = vector.load %arg1[%c0, %c0_0] : memref<16x128xf32, #tpu.memory_space<vmem>>, vector<16x128xf32>
    %cst = arith.constant 0.000000e+00 : f32
    %1 = vector.broadcast %cst : f32 to vector<16x128xf32>
    %2 = arith.cmpf oge, %0, %1 : vector<16x128xf32>
    %cst_1 = arith.constant 0.00999999977 : f32
    %3 = vector.broadcast %cst_1 : f32 to vector<16x128xf32>
    %4 = arith.mulf %0, %3 : vector<16x128xf32>
    %5 = arith.select %2, %0, %4 : vector<16x128xi1>, vector<16x128xf32>
    %c0_2 = arith.constant 0 : index
    %c0_3 = arith.constant 0 : index
    %6 = vector.load %arg2[%c0_2, %c0_3] : memref<16x128xf32, #tpu.memory_space<vmem>>, vector<16x128xf32>
    tpu.vector_store %arg2[%c0_2, %c0_3], %5 {strides = array<i32>} : memref<16x128xf32, #tpu.memory_space<vmem>>, vector<16x128xf32>,
    return
  }
  func.func @transform_0(%arg0: i32) -> (i32, i32) {
    %c0_i32 = arith.constant 0 : i32
    %c0_i32_0 = arith.constant 0 : i32
    return %arg0, %c0_i32 : i32, i32
  }
  func.func @transform_1(%arg0: i32) -> (i32, i32) {
    %c0_i32 = arith.constant 0 : i32
    %c0_i32_0 = arith.constant 0 : i32
    return %arg0, %c0_i32 : i32, i32
  }
}

</mosaic_0001>

<llo_original>
// kernel: tpu_custom_call.1
$region0: #{tpu_custom_call.1}
  #allocation0 [shape = 'u32[]', space=smem, size = 0x4, offset = 0x4, fixed_abs, tag = 'smem constant byte address 0x4 - core index']
  #allocation1 [shape = 'u32[144,128]{1,0:T(1,128)}', space=vmem, size = 0x12000, scoped, tag = 'internal scratch']
  %s0 = inlined_call_operand.hbm [shape: f32[16,128], index: 0, kind: input, shape index: {}]
  %s1 = inlined_call_operand.hbm [shape: f32[16,128], index: 1, kind: output, shape index: {}]
  %s2 = sld [smem:[#allocation0]]
  $region18: #{tpu_custom_call.1} parent=0
    _
  %s4 = ssub.s32 1, %s2
  %s5 = scalar_select 0, %s4, %s2
  $region1: #{tpu_custom_call.1} parent=0
    #allocation2 [shape = 'u8[8192]{0}', space=vmem, size = 0x2000, scoped, tag = 'input window, operand 0, single buffered']
    #allocation3 [shape = 's32[1]{0}', space=sflag, size = 0x4, scoped, tag = 'scoped memory for tpu_custom_call.1']
    #allocation4 [shape = 's32[1]{0}', space=sflag, size = 0x4, scoped, tag = 'scoped memory for tpu_custom_call.1']
    #allocation5 [shape = 'u8[8192]{0}', space=vmem, size = 0x2000, scoped, tag = 'output window, operand 0, single buffered']
    %6 = vsyncpa [#allocation3], 0
    %7 = vsyncpa [#allocation4], 0
    // Predicated region
    $region2: #{tpu_custom_call.1} parent=1 // pred_check
      _
    $region3: #{tpu_custom_call.1} parent=1 // pred_check_branch
      %9 = sbr.rel (0) target = $region5
    $region4: #{tpu_custom_call.1} parent=1 // pred_region
      %s11 = ssub.s32 256, 256
      %12 = vsyncadd [#allocation3], %s11
      %s13 = sshll.u32 [#allocation2], 4
      %s14 = int_to_ptr.vmem [resolvable:$true] %s13
      %19 = dma.hbm_to_vmem [thread:$0]  %s0, 256, %s14, [#allocation3], 128, 128, 8
    $region5: #{tpu_custom_call.1} parent=1 // pred_fallthru
      _
    // Predicated region
    $region6: #{tpu_custom_call.1} parent=1 // pred_check
      _
    $region7: #{tpu_custom_call.1} parent=1 // pred_check_branch
      %21 = sbr.rel (0) target = $region9
    $region8: #{tpu_custom_call.1} parent=1 // pred_region
      %22 = dma.done [#allocation3], 256
    $region9: #{tpu_custom_call.1} parent=1 // pred_fallthru
      _
    %v23 = vld [vmem:[#allocation2] sm:$0xff]
    %v24 = vld [vmem:[#allocation2 + $0x8] sm:$0xff]
    %vm25 = vcmp.ge.f32.partialorder %v23, 0.0
    %vm26 = vcmp.ge.f32.partialorder %v24, 0.0
    %v27 = vmul.f32 %v23, 0.01
    %v28 = vmul.f32 %v24, 0.01
    %v29 = vsel %vm25, %v23, %v27
    %v30 = vsel %vm26, %v24, %v28
    %31 = vst [vmem:[#allocation5] sm:$0xff] %v29
    %32 = vst [vmem:[#allocation5 + $0x8] sm:$0xff] %v30
    // Predicated region
    $region10: #{tpu_custom_call.1} parent=1 // pred_check
      _
    $region11: #{tpu_custom_call.1} parent=1 // pred_check_branch
      %34 = sbr.rel (0) target = $region13
    $region12: #{tpu_custom_call.1} parent=1 // pred_region
      %s36 = ssub.s32 256, 256
      %37 = vsyncadd [#allocation4], %s36
      %s38 = sshll.u32 [#allocation5], 4
      %s39 = int_to_ptr.vmem [resolvable:$true] %s38
      %44 = dma.vmem_to_hbm [thread:$0]  %s39, 256, %s1, [#allocation4], 128, 128, 8
    $region13: #{tpu_custom_call.1} parent=1 // pred_fallthru
      _
    // Predicated region
    $region14: #{tpu_custom_call.1} parent=1 // pred_check
      _
    $region15: #{tpu_custom_call.1} parent=1 // pred_check_branch
      %46 = sbr.rel (0) target = $region17
    $region16: #{tpu_custom_call.1} parent=1 // pred_region
      %47 = dma.done [#allocation4], 256
    $region17: #{tpu_custom_call.1} parent=1 // pred_fallthru
      _
    %48 = vsyncpa [#allocation3], 1
    %49 = vsyncpa [#allocation4], 1

</llo_original>
